<compile_context>
chip_gen: v5e
topology: v5e:2x2
jax: 0.10.0
libtpu: 0.0.40
codegen_flags: <defaults>
</compile_context>

<pallas_src>
import jax
import jax.numpy as jnp
from jax import lax
from jax.experimental import pallas as pl
from jax.experimental.pallas import tpu as pltpu

K_TAPS = 7
PAD = 3


def _round_up(v, m):
    return ((v + m - 1) // m) * m


def _pick_batch_fold(n_batch, l_pad, target_lanes=4096):
    """How many batch rows to fold into one grid step's lane axis."""
    n = max(1, min(n_batch, target_lanes // l_pad))
    # keep >= 2 grid steps when possible: v7x has 2 TensorCores per chip.
    while n > 1 and n_batch // n < 2:
        n -= 1
    while n_batch % n:
        n -= 1
    return n


# -------------------------------- wrapper ------------------------------------
def final_layer_forward(x, w1, b1, gamma, beta, mean, var, w2, b2, eps=1e-5):
    """x: (N, C_in, L) -> (N, L, 2), matching final_layer.forward (eval BN)."""
    N, c_in, L = x.shape
    c_half = w1.shape[0]
    assert w1.shape == (c_half, c_in, K_TAPS)

    # ---- fold BN (running stats) + conv1 bias into per-channel scale/bias ---
    inv_std = gamma.astype(jnp.float32) * lax.rsqrt(var.astype(jnp.float32) + eps)
    scale = inv_std.reshape(c_half, 1)
    bias = (beta.astype(jnp.float32)
            + (b1.astype(jnp.float32) - mean.astype(jnp.float32)) * inv_std
            ).reshape(c_half, 1)

    # ---- im2col weight layout: w1_flat[o, k*c_in + c] == w1[o, c, k] --------
    w1_flat = (jnp.transpose(w1, (0, 2, 1))
               .reshape(c_half, K_TAPS * c_in).astype(jnp.bfloat16))
    w2_m = w2.reshape(2, c_half).astype(jnp.bfloat16)
    b2_c = b2.reshape(2, 1).astype(jnp.float32)

    # ---- pad L to a lane-dense multiple of 128, fold batch into lanes -------
    l_pad = max(128, _round_up(L, 128))
    x_f = x if x.dtype in (jnp.float32, jnp.bfloat16) else x.astype(jnp.float32)
    if l_pad != L:
        # zero padding on the right reproduces the conv's own zero padding for
        # taps that reach past column L-1; the extra output columns are sliced
        # off after the kernel.
        x_f = jnp.pad(x_f, ((0, 0), (0, 0), (0, l_pad - L)))
    x_planar = jnp.transpose(x_f, (1, 0, 2)).reshape(c_in, N * l_pad)

    n_per_step = _pick_batch_fold(N, l_pad)
    chunk = n_per_step * l_pad                      # lanes per grid step
    num_steps = N // n_per_step

    # ------------------------------ fused kernel -----------------------------
    def kernel(x_ref, w1_ref, sc_ref, bi_ref, w2_ref, b2_ref, out_ref, col_ref):
        xv = x_ref[...]                                     # (c_in, chunk)
        # lane position inside one (padded) batch row: conv taps must not
        # bleed across the batch boundaries folded into the lane axis.
        lane = lax.broadcasted_iota(jnp.int32, (1, chunk), 1)
        if l_pad & (l_pad - 1) == 0:                        # power of two
            r = lane & (l_pad - 1)
        else:
            r = lane % l_pad

        # im2col: stack the 7 shifted + masked copies along sublanes (bf16).
        for k in range(K_TAPS):                             # static unroll
            d = k - PAD
            if d == 0:
                xs = xv
            else:
                rolled = pltpu.roll(xv, shift=(-d) % chunk, axis=1)  # XLU shift
                valid = jnp.logical_and(r + d >= 0, r + d < l_pad)
                xs = jnp.where(valid, rolled, jnp.zeros_like(rolled))
            col_ref[pl.ds(k * c_in, c_in), :] = xs.astype(jnp.bfloat16)

        # conv7 as ONE MXU matmul over the 7*c_in-deep contraction (f32 acc).
        acc = jnp.dot(w1_ref[...], col_ref[...],
                      preferred_element_type=jnp.float32)   # (c_half, chunk)

        # folded conv-bias + BatchNorm, then ReLU -- f32 on the VPU.
        h = jnp.maximum(acc * sc_ref[...] + bi_ref[...], 0.0)

        # 1x1 conv + bias + sigmoid (bf16 MXU operands, f32 everywhere else).
        z = jnp.dot(w2_ref[...], h.astype(jnp.bfloat16),
                    preferred_element_type=jnp.float32) + b2_ref[...]
        z = jnp.clip(z, -30.0, 30.0)            # keep exp finite for approx rcp
        out_ref[...] = pl.reciprocal(1.0 + jnp.exp(-z), approx=True)

    cost = pl.CostEstimate(
        flops=int(N * l_pad * (2 * c_half * K_TAPS * c_in      # conv7 matmul
                               + 2 * 2 * c_half                # 1x1 conv
                               + 4 * c_half + 8)),             # bn/relu/sigmoid
        transcendentals=int(N * l_pad * 2),                    # sigmoid exp/rcp
        bytes_accessed=int(4 * c_in * N * l_pad + 4 * 2 * N * l_pad
                           + 2 * c_half * K_TAPS * c_in
                           + 2 * 2 * c_half + 4 * (3 * c_half + 2)),
    )

    out_planar = pl.pallas_call(
        kernel,
        out_shape=jax.ShapeDtypeStruct((2, N * l_pad), jnp.float32),
        grid=(num_steps,),
        in_specs=[
            pl.BlockSpec((c_in, chunk), lambda i: (0, i)),
            pl.BlockSpec((c_half, K_TAPS * c_in), lambda i: (0, 0)),
            pl.BlockSpec((c_half, 1), lambda i: (0, 0)),
            pl.BlockSpec((c_half, 1), lambda i: (0, 0)),
            pl.BlockSpec((2, c_half), lambda i: (0, 0)),
            pl.BlockSpec((2, 1), lambda i: (0, 0)),
        ],
        out_specs=pl.BlockSpec((2, chunk), lambda i: (0, i)),
        scratch_shapes=[pltpu.VMEM((K_TAPS * c_in, chunk), jnp.bfloat16)],
        compiler_params=pltpu.CompilerParams(
            dimension_semantics=("parallel",)),
        cost_estimate=cost,
    )(x_planar, w1_flat, scale, bias, w2_m, b2_c)

    # module's permute(0, 2, 1): channel-planar (2, N, L_pad) -> (N, L, 2)
    out = jnp.transpose(out_planar.reshape(2, N, l_pad), (1, 2, 0))
    if l_pad != L:
        out = out[:, :L, :]
    return out


# ------------------------------- reference -----------------------------------
def final_layer_ref(x, w1, b1, gamma, beta, mean, var, w2, b2, eps=1e-5):
    N, c_in, L = x.shape
    c_half, _, K = w1.shape
    xp = jnp.pad(x, ((0, 0), (0, 0), (PAD, PAD)))
    cols = jnp.stack([xp[:, :, k:k + L] for k in range(K)], axis=-1)  # (N,C,L,K)
    y = jnp.einsum('nclk,ock->nol', cols, w1, precision='highest')
    y = y + b1[None, :, None]
    y = (y - mean[None, :, None]) / jnp.sqrt(var[None, :, None] + eps)
    y = y * gamma[None, :, None] + beta[None, :, None]
    y = jnp.maximum(y, 0.0)
    z = jnp.einsum('ncl,oc->nol', y, w2.reshape(2, c_half), precision='highest')
    z = z + b2[None, :, None]
    z = jax.nn.sigmoid(z)
    return jnp.transpose(z, (0, 2, 1))


# ---------------------------------- main --------------------------------------
if __name__ == "__main__":
    key = jax.random.PRNGKey(0)
    ks = jax.random.split(key, 9)

    N, C_IN, L = 2, 32, 128            # batch, input channels, sequence length
    C_HALF = C_IN // 2

    x = jax.random.normal(ks[0], (N, C_IN, L), dtype=jnp.float32)
    w1 = jax.random.normal(ks[1], (C_HALF, C_IN, K_TAPS), dtype=jnp.float32) * 0.2
    b1 = jax.random.normal(ks[2], (C_HALF,), dtype=jnp.float32) * 0.1
    gamma = jax.random.uniform(ks[3], (C_HALF,), minval=0.5, maxval=1.5,
                               dtype=jnp.float32)
    beta = jax.random.normal(ks[4], (C_HALF,), dtype=jnp.float32) * 0.1
    mean = jax.random.normal(ks[5], (C_HALF,), dtype=jnp.float32) * 0.1
    var = jax.random.uniform(ks[6], (C_HALF,), minval=0.5, maxval=1.5,
                             dtype=jnp.float32)
    w2 = jax.random.normal(ks[7], (2, C_HALF, 1), dtype=jnp.float32) * 0.3
    b2 = jax.random.normal(ks[8], (2,), dtype=jnp.float32) * 0.1

    out = jax.block_until_ready(
        final_layer_forward(x, w1, b1, gamma, beta, mean, var, w2, b2))
    ref = final_layer_ref(x, w1, b1, gamma, beta, mean, var, w2, b2)

    assert out.shape == (N, L, 2), out.shape
    max_err = float(jnp.max(jnp.abs(out - ref)))
    # bf16 MXU operands with f32 accumulation: worst-case logit error is
    # O(1e-2) and the sigmoid's <=0.25 slope shrinks it further, so 2e-2 is a
    # wide margin (measured max error is ~1e-3 at these shapes).
    assert jnp.allclose(out, ref, rtol=2e-2, atol=2e-2), max_err

    print("KERNEL_OK")
</pallas_src>

<mosaic_0001>
module attributes {stable_mosaic.version = 11 : i64} {
  func.func @kernel(%arg0: i32, %arg1: memref<32x128xf32, #tpu.memory_space<vmem>>, %arg2: memref<16x224xbf16, #tpu.memory_space<vmem>>, %arg3: memref<16x1xf32, #tpu.memory_space<vmem>>, %arg4: memref<16x1xf32, #tpu.memory_space<vmem>>, %arg5: memref<2x16xbf16, #tpu.memory_space<vmem>>, %arg6: memref<2x1xf32, #tpu.memory_space<vmem>>, %arg7: memref<2x128xf32, #tpu.memory_space<vmem>>, %arg8: memref<224x128xbf16, #tpu.memory_space<vmem>>) attributes {dimension_semantics = [#tpu.dimension_semantics<parallel>], iteration_bounds = array<i64: 2>, scalar_prefetch = 0 : i64, scratch_operands = 1 : i64, tpu.core_type = #tpu.core_type<tc>, window_params = [{transform_indices = @transform_0, window_bounds = array<i64: 32, 128>}, {pipeline_mode = #tpu.pipeline_mode<synchronous>, transform_indices = @transform_1, window_bounds = array<i64: 16, 224>}, {pipeline_mode = #tpu.pipeline_mode<synchronous>, transform_indices = @transform_2, window_bounds = array<i64: 16, 1>}, {pipeline_mode = #tpu.pipeline_mode<synchronous>, transform_indices = @transform_3, window_bounds = array<i64: 16, 1>}, {pipeline_mode = #tpu.pipeline_mode<synchronous>, transform_indices = @transform_4, window_bounds = array<i64: 2, 16>}, {pipeline_mode = #tpu.pipeline_mode<synchronous>, transform_indices = @transform_5, window_bounds = array<i64: 2, 1>}, {transform_indices = @transform_6, window_bounds = array<i64: 2, 128>}]} {
    %c0 = arith.constant 0 : index
    %c0_0 = arith.constant 0 : index
    %0 = vector.load %arg1[%c0, %c0_0] : memref<32x128xf32, #tpu.memory_space<vmem>>, vector<32x128xf32>
    %1 = tpu.iota {dimensions = array<i32: 1>} : vector<1x128xi32>
    %c127_i32 = arith.constant 127 : i32
    %2 = vector.broadcast %c127_i32 : i32 to vector<1x128xi32>
    %3 = arith.andi %1, %2 : vector<1x128xi32>
    %c3_i32 = arith.constant 3 : i32
    %4 = tpu.dynamic_rotate %0 by %c3_i32 dim 1 : vector<32x128xf32>, i32 -> vector<32x128xf32>
    %c-3_i32 = arith.constant -3 : i32
    %5 = vector.broadcast %c-3_i32 : i32 to vector<1x128xi32>
    %6 = arith.addi %3, %5 : vector<1x128xi32>
    %c0_i32 = arith.constant 0 : i32
    %7 = vector.broadcast %c0_i32 : i32 to vector<1x128xi32>
    %8 = arith.cmpi sge, %6, %7 : vector<1x128xi32>
    %c-3_i32_1 = arith.constant -3 : i32
    %9 = vector.broadcast %c-3_i32_1 : i32 to vector<1x128xi32>
    %10 = arith.addi %3, %9 : vector<1x128xi32>
    %c128_i32 = arith.constant 128 : i32
    %11 = vector.broadcast %c128_i32 : i32 to vector<1x128xi32>
    %12 = arith.cmpi slt, %10, %11 : vector<1x128xi32>
    %13 = arith.andi %8, %12 : vector<1x128xi1>
    %cst = arith.constant 0.000000e+00 : f32
    %14 = vector.broadcast %cst : f32 to vector<32x128xf32>
    %15 = vector.shape_cast %13 : vector<1x128xi1> to vector<1x128xi1>
    %16 = vector.broadcast %15 : vector<1x128xi1> to vector<32x128xi1>
    %17 = arith.select %16, %4, %14 : vector<32x128xi1>, vector<32x128xf32>
    %18 = arith.truncf %17 : vector<32x128xf32> to vector<32x128xbf16>
    %c0_2 = arith.constant 0 : index
    %c0_3 = arith.constant 0 : index
    %19 = vector.load %arg8[%c0_2, %c0_3] : memref<224x128xbf16, #tpu.memory_space<vmem>>, vector<32x128xbf16>
    tpu.vector_store %arg8[%c0_2, %c0_3], %18 {strides = array<i32>} : memref<224x128xbf16, #tpu.memory_space<vmem>>, vector<32x128xbf16>,
    %c2_i32 = arith.constant 2 : i32
    %20 = tpu.dynamic_rotate %0 by %c2_i32 dim 1 : vector<32x128xf32>, i32 -> vector<32x128xf32>
    %c-2_i32 = arith.constant -2 : i32
    %21 = vector.broadcast %c-2_i32 : i32 to vector<1x128xi32>
    %22 = arith.addi %3, %21 : vector<1x128xi32>
    %c0_i32_4 = arith.constant 0 : i32
    %23 = vector.broadcast %c0_i32_4 : i32 to vector<1x128xi32>
    %24 = arith.cmpi sge, %22, %23 : vector<1x128xi32>
    %c-2_i32_5 = arith.constant -2 : i32
    %25 = vector.broadcast %c-2_i32_5 : i32 to vector<1x128xi32>
    %26 = arith.addi %3, %25 : vector<1x128xi32>
    %c128_i32_6 = arith.constant 128 : i32
    %27 = vector.broadcast %c128_i32_6 : i32 to vector<1x128xi32>
    %28 = arith.cmpi slt, %26, %27 : vector<1x128xi32>
    %29 = arith.andi %24, %28 : vector<1x128xi1>
    %cst_7 = arith.constant 0.000000e+00 : f32
    %30 = vector.broadcast %cst_7 : f32 to vector<32x128xf32>
    %31 = vector.shape_cast %29 : vector<1x128xi1> to vector<1x128xi1>
    %32 = vector.broadcast %31 : vector<1x128xi1> to vector<32x128xi1>
    %33 = arith.select %32, %20, %30 : vector<32x128xi1>, vector<32x128xf32>
    %34 = arith.truncf %33 : vector<32x128xf32> to vector<32x128xbf16>
    %c32 = arith.constant 32 : index
    %c0_8 = arith.constant 0 : index
    %35 = vector.load %arg8[%c32, %c0_8] : memref<224x128xbf16, #tpu.memory_space<vmem>>, vector<32x128xbf16>
    tpu.vector_store %arg8[%c32, %c0_8], %34 {strides = array<i32>} : memref<224x128xbf16, #tpu.memory_space<vmem>>, vector<32x128xbf16>,
    %c1_i32 = arith.constant 1 : i32
    %36 = tpu.dynamic_rotate %0 by %c1_i32 dim 1 : vector<32x128xf32>, i32 -> vector<32x128xf32>
    %c-1_i32 = arith.constant -1 : i32
    %37 = vector.broadcast %c-1_i32 : i32 to vector<1x128xi32>
    %38 = arith.addi %3, %37 : vector<1x128xi32>
    %c0_i32_9 = arith.constant 0 : i32
    %39 = vector.broadcast %c0_i32_9 : i32 to vector<1x128xi32>
    %40 = arith.cmpi sge, %38, %39 : vector<1x128xi32>
    %c-1_i32_10 = arith.constant -1 : i32
    %41 = vector.broadcast %c-1_i32_10 : i32 to vector<1x128xi32>
    %42 = arith.addi %3, %41 : vector<1x128xi32>
    %c128_i32_11 = arith.constant 128 : i32
    %43 = vector.broadcast %c128_i32_11 : i32 to vector<1x128xi32>
    %44 = arith.cmpi slt, %42, %43 : vector<1x128xi32>
    %45 = arith.andi %40, %44 : vector<1x128xi1>
    %cst_12 = arith.constant 0.000000e+00 : f32
    %46 = vector.broadcast %cst_12 : f32 to vector<32x128xf32>
    %47 = vector.shape_cast %45 : vector<1x128xi1> to vector<1x128xi1>
    %48 = vector.broadcast %47 : vector<1x128xi1> to vector<32x128xi1>
    %49 = arith.select %48, %36, %46 : vector<32x128xi1>, vector<32x128xf32>
    %50 = arith.truncf %49 : vector<32x128xf32> to vector<32x128xbf16>
    %c64 = arith.constant 64 : index
    %c0_13 = arith.constant 0 : index
    %51 = vector.load %arg8[%c64, %c0_13] : memref<224x128xbf16, #tpu.memory_space<vmem>>, vector<32x128xbf16>
    tpu.vector_store %arg8[%c64, %c0_13], %50 {strides = array<i32>} : memref<224x128xbf16, #tpu.memory_space<vmem>>, vector<32x128xbf16>,
    %52 = arith.truncf %0 : vector<32x128xf32> to vector<32x128xbf16>
    %c96 = arith.constant 96 : index
    %c0_14 = arith.constant 0 : index
    %53 = vector.load %arg8[%c96, %c0_14] : memref<224x128xbf16, #tpu.memory_space<vmem>>, vector<32x128xbf16>
    tpu.vector_store %arg8[%c96, %c0_14], %52 {strides = array<i32>} : memref<224x128xbf16, #tpu.memory_space<vmem>>, vector<32x128xbf16>,
    %c127_i32_15 = arith.constant 127 : i32
    %54 = tpu.dynamic_rotate %0 by %c127_i32_15 dim 1 : vector<32x128xf32>, i32 -> vector<32x128xf32>
    %c1_i32_16 = arith.constant 1 : i32
    %55 = vector.broadcast %c1_i32_16 : i32 to vector<1x128xi32>
    %56 = arith.addi %3, %55 : vector<1x128xi32>
    %c0_i32_17 = arith.constant 0 : i32
    %57 = vector.broadcast %c0_i32_17 : i32 to vector<1x128xi32>
    %58 = arith.cmpi sge, %56, %57 : vector<1x128xi32>
    %c1_i32_18 = arith.constant 1 : i32
    %59 = vector.broadcast %c1_i32_18 : i32 to vector<1x128xi32>
    %60 = arith.addi %3, %59 : vector<1x128xi32>
    %c128_i32_19 = arith.constant 128 : i32
    %61 = vector.broadcast %c128_i32_19 : i32 to vector<1x128xi32>
    %62 = arith.cmpi slt, %60, %61 : vector<1x128xi32>
    %63 = arith.andi %58, %62 : vector<1x128xi1>
    %cst_20 = arith.constant 0.000000e+00 : f32
    %64 = vector.broadcast %cst_20 : f32 to vector<32x128xf32>
    %65 = vector.shape_cast %63 : vector<1x128xi1> to vector<1x128xi1>
    %66 = vector.broadcast %65 : vector<1x128xi1> to vector<32x128xi1>
    %67 = arith.select %66, %54, %64 : vector<32x128xi1>, vector<32x128xf32>
    %68 = arith.truncf %67 : vector<32x128xf32> to vector<32x128xbf16>
    %c128 = arith.constant 128 : index
    %c0_21 = arith.constant 0 : index
    %69 = vector.load %arg8[%c128, %c0_21] : memref<224x128xbf16, #tpu.memory_space<vmem>>, vector<32x128xbf16>
    tpu.vector_store %arg8[%c128, %c0_21], %68 {strides = array<i32>} : memref<224x128xbf16, #tpu.memory_space<vmem>>, vector<32x128xbf16>,
    %c126_i32 = arith.constant 126 : i32
    %70 = tpu.dynamic_rotate %0 by %c126_i32 dim 1 : vector<32x128xf32>, i32 -> vector<32x128xf32>
    %c2_i32_22 = arith.constant 2 : i32
    %71 = vector.broadcast %c2_i32_22 : i32 to vector<1x128xi32>
    %72 = arith.addi %3, %71 : vector<1x128xi32>
    %c0_i32_23 = arith.constant 0 : i32
    %73 = vector.broadcast %c0_i32_23 : i32 to vector<1x128xi32>
    %74 = arith.cmpi sge, %72, %73 : vector<1x128xi32>
    %c2_i32_24 = arith.constant 2 : i32
    %75 = vector.broadcast %c2_i32_24 : i32 to vector<1x128xi32>
    %76 = arith.addi %3, %75 : vector<1x128xi32>
    %c128_i32_25 = arith.constant 128 : i32
    %77 = vector.broadcast %c128_i32_25 : i32 to vector<1x128xi32>
    %78 = arith.cmpi slt, %76, %77 : vector<1x128xi32>
    %79 = arith.andi %74, %78 : vector<1x128xi1>
    %cst_26 = arith.constant 0.000000e+00 : f32
    %80 = vector.broadcast %cst_26 : f32 to vector<32x128xf32>
    %81 = vector.shape_cast %79 : vector<1x128xi1> to vector<1x128xi1>
    %82 = vector.broadcast %81 : vector<1x128xi1> to vector<32x128xi1>
    %83 = arith.select %82, %70, %80 : vector<32x128xi1>, vector<32x128xf32>
    %84 = arith.truncf %83 : vector<32x128xf32> to vector<32x128xbf16>
    %c160 = arith.constant 160 : index
    %c0_27 = arith.constant 0 : index
    %85 = vector.load %arg8[%c160, %c0_27] : memref<224x128xbf16, #tpu.memory_space<vmem>>, vector<32x128xbf16>
    tpu.vector_store %arg8[%c160, %c0_27], %84 {strides = array<i32>} : memref<224x128xbf16, #tpu.memory_space<vmem>>, vector<32x128xbf16>,
    %c125_i32 = arith.constant 125 : i32
    %86 = tpu.dynamic_rotate %0 by %c125_i32 dim 1 : vector<32x128xf32>, i32 -> vector<32x128xf32>
    %c3_i32_28 = arith.constant 3 : i32
    %87 = vector.broadcast %c3_i32_28 : i32 to vector<1x128xi32>
    %88 = arith.addi %3, %87 : vector<1x128xi32>
    %c0_i32_29 = arith.constant 0 : i32
    %89 = vector.broadcast %c0_i32_29 : i32 to vector<1x128xi32>
    %90 = arith.cmpi sge, %88, %89 : vector<1x128xi32>
    %c3_i32_30 = arith.constant 3 : i32
    %91 = vector.broadcast %c3_i32_30 : i32 to vector<1x128xi32>
    %92 = arith.addi %3, %91 : vector<1x128xi32>
    %c128_i32_31 = arith.constant 128 : i32
    %93 = vector.broadcast %c128_i32_31 : i32 to vector<1x128xi32>
    %94 = arith.cmpi slt, %92, %93 : vector<1x128xi32>
    %95 = arith.andi %90, %94 : vector<1x128xi1>
    %cst_32 = arith.constant 0.000000e+00 : f32
    %96 = vector.broadcast %cst_32 : f32 to vector<32x128xf32>
    %97 = vector.shape_cast %95 : vector<1x128xi1> to vector<1x128xi1>
    %98 = vector.broadcast %97 : vector<1x128xi1> to vector<32x128xi1>
    %99 = arith.select %98, %86, %96 : vector<32x128xi1>, vector<32x128xf32>
    %100 = arith.truncf %99 : vector<32x128xf32> to vector<32x128xbf16>
    %c192 = arith.constant 192 : index
    %c0_33 = arith.constant 0 : index
    %101 = vector.load %arg8[%c192, %c0_33] : memref<224x128xbf16, #tpu.memory_space<vmem>>, vector<32x128xbf16>
    tpu.vector_store %arg8[%c192, %c0_33], %100 {strides = array<i32>} : memref<224x128xbf16, #tpu.memory_space<vmem>>, vector<32x128xbf16>,
    %c0_34 = arith.constant 0 : index
    %c0_35 = arith.constant 0 : index
    %102 = vector.load %arg2[%c0_34, %c0_35] : memref<16x224xbf16, #tpu.memory_space<vmem>>, vector<16x224xbf16>
    %c0_36 = arith.constant 0 : index
    %c0_37 = arith.constant 0 : index
    %103 = vector.load %arg8[%c0_36, %c0_37] : memref<224x128xbf16, #tpu.memory_space<vmem>>, vector<224x128xbf16>
    %cst_38 = arith.constant dense<0.000000e+00> : vector<16x128xf32>
    %104 = tpu.matmul %102, %103, %cst_38 {dimension_numbers = #tpu.dot_dimension_numbers<[1], [0], [0], [1], [0, 0, 1, 1], [], []>} : vector<16x224xbf16>, vector<224x128xbf16>, vector<16x128xf32> -> vector<16x128xf32>
    %c0_39 = arith.constant 0 : index
    %c0_40 = arith.constant 0 : index
    %105 = vector.load %arg3[%c0_39, %c0_40] : memref<16x1xf32, #tpu.memory_space<vmem>>, vector<16x1xf32>
    %106 = vector.broadcast %105 : vector<16x1xf32> to vector<16x128xf32>
    %107 = arith.mulf %104, %106 : vector<16x128xf32>
    %c0_41 = arith.constant 0 : index
    %c0_42 = arith.constant 0 : index
    %108 = vector.load %arg4[%c0_41, %c0_42] : memref<16x1xf32, #tpu.memory_space<vmem>>, vector<16x1xf32>
    %109 = vector.broadcast %108 : vector<16x1xf32> to vector<16x128xf32>
    %110 = arith.addf %107, %109 : vector<16x128xf32>
    %cst_43 = arith.constant 0.000000e+00 : f32
    %111 = vector.broadcast %cst_43 : f32 to vector<16x128xf32>
    %112 = arith.maximumf %110, %111 : vector<16x128xf32>
    %c0_44 = arith.constant 0 : index
    %c0_45 = arith.constant 0 : index
    %113 = vector.load %arg5[%c0_44, %c0_45] : memref<2x16xbf16, #tpu.memory_space<vmem>>, vector<2x16xbf16>
    %114 = arith.truncf %112 : vector<16x128xf32> to vector<16x128xbf16>
    %cst_46 = arith.constant dense<0.000000e+00> : vector<2x128xf32>
    %115 = tpu.matmul %113, %114, %cst_46 {dimension_numbers = #tpu.dot_dimension_numbers<[1], [0], [0], [1], [0, 0, 1, 1], [], []>} : vector<2x16xbf16>, vector<16x128xbf16>, vector<2x128xf32> -> vector<2x128xf32>
    %c0_47 = arith.constant 0 : index
    %c0_48 = arith.constant 0 : index
    %116 = vector.load %arg6[%c0_47, %c0_48] : memref<2x1xf32, #tpu.memory_space<vmem>>, vector<2x1xf32>
    %117 = vector.broadcast %116 : vector<2x1xf32> to vector<2x128xf32>
    %118 = arith.addf %115, %117 : vector<2x128xf32>
    %cst_49 = arith.constant -3.000000e+01 : f32
    %cst_50 = arith.constant 3.000000e+01 : f32
    %119 = vector.broadcast %cst_49 : f32 to vector<2x128xf32>
    %120 = arith.maximumf %119, %118 : vector<2x128xf32>
    %121 = vector.broadcast %cst_50 : f32 to vector<2x128xf32>
    %122 = arith.minimumf %121, %120 : vector<2x128xf32>
    %cst_51 = arith.constant 0.000000e+00 : f32
    %123 = vector.broadcast %cst_51 : f32 to vector<2x128xf32>
    %124 = arith.subf %123, %122 : vector<2x128xf32>
    %125 = math.exp %124 : vector<2x128xf32>
    %cst_52 = arith.constant 1.000000e+00 : f32
    %126 = vector.broadcast %cst_52 : f32 to vector<2x128xf32>
    %127 = arith.addf %126, %125 : vector<2x128xf32>
    %128 = tpu.reciprocal %127 {approx = true} : vector<2x128xf32> -> vector<2x128xf32>
    %c0_53 = arith.constant 0 : index
    %c0_54 = arith.constant 0 : index
    %129 = vector.load %arg7[%c0_53, %c0_54] : memref<2x128xf32, #tpu.memory_space<vmem>>, vector<2x128xf32>
    tpu.vector_store %arg7[%c0_53, %c0_54], %128 {strides = array<i32>} : memref<2x128xf32, #tpu.memory_space<vmem>>, vector<2x128xf32>,
    return
  }
  func.func @transform_0(%arg0: i32) -> (i32, i32) {
    %c0_i32 = arith.constant 0 : i32
    %c0_i32_0 = arith.constant 0 : i32
    return %c0_i32, %arg0 : i32, i32
  }
  func.func @transform_1(%arg0: i32) -> (i32, i32) {
    %c0_i32 = arith.constant 0 : i32
    %c0_i32_0 = arith.constant 0 : i32
    %c0_i32_1 = arith.constant 0 : i32
    return %c0_i32, %c0_i32_0 : i32, i32
  }
  func.func @transform_2(%arg0: i32) -> (i32, i32) {
    %c0_i32 = arith.constant 0 : i32
    %c0_i32_0 = arith.constant 0 : i32
    %c0_i32_1 = arith.constant 0 : i32
    return %c0_i32, %c0_i32_0 : i32, i32
  }
  func.func @transform_3(%arg0: i32) -> (i32, i32) {
    %c0_i32 = arith.constant 0 : i32
    %c0_i32_0 = arith.constant 0 : i32
    %c0_i32_1 = arith.constant 0 : i32
    return %c0_i32, %c0_i32_0 : i32, i32
  }
  func.func @transform_4(%arg0: i32) -> (i32, i32) {
    %c0_i32 = arith.constant 0 : i32
    %c0_i32_0 = arith.constant 0 : i32
    %c0_i32_1 = arith.constant 0 : i32
    return %c0_i32, %c0_i32_0 : i32, i32
  }
  func.func @transform_5(%arg0: i32) -> (i32, i32) {
    %c0_i32 = arith.constant 0 : i32
    %c0_i32_0 = arith.constant 0 : i32
    %c0_i32_1 = arith.constant 0 : i32
    return %c0_i32, %c0_i32_0 : i32, i32
  }
  func.func @transform_6(%arg0: i32) -> (i32, i32) {
    %c0_i32 = arith.constant 0 : i32
    %c0_i32_0 = arith.constant 0 : i32
    return %c0_i32, %arg0 : i32, i32
  }
}

</mosaic_0001>

<llo_original>
// kernel: tpu_custom_call.1
$region0: #{tpu_custom_call.1}
  #allocation0 [shape = 'u32[]', space=smem, size = 0x4, offset = 0x4, fixed_abs, tag = 'smem constant byte address 0x4 - core index']
  #allocation1 [shape = 'u32[72,128]{1,0:T(1,128)}', space=vmem, size = 0x9000, scoped, tag = 'internal scratch']
  #allocation2 [shape = 'bf16[224,128]{1,0:T(8,128)(2,1)}', space=vmem, size = 0xe000, scoped, tag = 'scratch operand']
  %s0 = inlined_call_operand.hbm [shape: f32[32,256], index: 0, kind: input, shape index: {}]
  %s1 = inlined_call_operand.vmem [shape: bf16[16,224], index: 1, kind: input, shape index: {}]
  %s2 = inlined_call_operand.vmem [shape: f32[16,1], index: 2, kind: input, shape index: {}]
  %s3 = inlined_call_operand.vmem [shape: f32[16,1], index: 3, kind: input, shape index: {}]
  %s4 = inlined_call_operand.vmem [shape: bf16[2,16], index: 4, kind: input, shape index: {}]
  %s5 = inlined_call_operand.vmem [shape: f32[2,1], index: 5, kind: input, shape index: {}]
  %s6 = inlined_call_operand.hbm [shape: f32[2,256], index: 6, kind: output, shape index: {}]
  %s7 = sld [smem:[#allocation0]]
  $region61: #{tpu_custom_call.1} parent=0
    _
  %s9 = ssub.s32 1, %s7
  %s10 = scalar_select 0, %s9, %s7
  $region1: #{tpu_custom_call.1} parent=0
    #allocation3 [shape = 'u8[32768]{0}', space=vmem, size = 0x8000, scoped, tag = 'input window, operand 0']
    #allocation4 [shape = 's32[2]{0}', space=sflag, size = 0x8, scoped, tag = 'scoped memory for tpu_custom_call.1']
    #allocation5 [shape = 's32[2]{0}', space=sflag, size = 0x8, scoped, tag = 'scoped memory for tpu_custom_call.1']
    #allocation6 [shape = 'u8[2048]{0}', space=vmem, size = 0x800, scoped, tag = 'output window, operand 0']
    %11 = vsyncpa [#allocation4], 0
    %s12 = scalar_lea.sflag [#allocation4], 1
    %13 = vsyncpa %s12, 0
    %14 = vsyncpa [#allocation5], 0
    %s15 = scalar_lea.sflag [#allocation5], 1
    %16 = vsyncpa %s15, 0
    loop: start=0, step=1, limit=4
    $region2: #{tpu_custom_call.1} parent=1 // loop_pre_header
      _
    $region3: #{tpu_custom_call.1} parent=1 // loop_header
      %s18 = sphi 0, %s22
      %p19 = scmp.ge.s32.totalorder %s18, 4
      %s28 = sphi 0, %s30
      %s31 = sphi 0, %s28
      %s32 = sphi 0, %s31
      %s48 = sphi 0, %s32
      %s52 = sphi 0, %s52
      %s54 = sphi 0, %s52
      %s55 = sphi 0, %s54
      %s69 = sphi 0, %s55
      %s73 = sphi 0, %s73
      %s75 = sphi 0, %s73
      %s76 = sphi 0, %s75
      %s90 = sphi 0, %s76
      %s94 = sphi 0, %s94
      %s96 = sphi 0, %s94
      %s97 = sphi 0, %s96
      %s111 = sphi 0, %s97
      %s115 = sphi 0, %s115
      %s117 = sphi 0, %s115
      %s118 = sphi 0, %s117
      %s132 = sphi 0, %s118
      %s136 = sphi 0, %s136
      %s138 = sphi 0, %s136
      %s139 = sphi 0, %s138
      %s153 = sphi 0, %s139
      %s159 = sphi 0, %s161
      %s162 = sphi 0, %s159
      %s163 = sphi 0, %s162
      %s179 = sphi 0, %s163
    $region4: #{tpu_custom_call.1} parent=1 // loop_header_branch
      %21 = sbr.rel (%p19) target = $region8
    $region5: #{tpu_custom_call.1} parent=1 // loop_body
      %s23 = ssub.s32 %s18, 1
      %s24 = ssub.s32 %s18, 2
      %s25 = sadd.s32 %s18, 1
      %s26 = ssub.s32 %s18, %s25
      %p27 = scmp.eq.s32.totalorder %s26, 0
      %s29 = sadd.s32 %s28, 1
      %s30 = scalar_select %p27, %s28, %s29
      %p33 = pneg %p27
      %p34 = scmp.eq.s32.totalorder %s18, 1
      %p35 = por %p33, %p34
      %p36 = scmp.ne.s32.totalorder %s28, %s31
      %p37 = scmp.eq.s32.totalorder %s18, 0
      %p38 = por %p36, %p37
      %p39 = scmp.ne.s32.totalorder %s28, %s31
      %p40 = scmp.eq.s32.totalorder %s23, 1
      %p41 = por %p39, %p40
      %p42 = scmp.ne.s32.totalorder %s31, %s32
      %p43 = scmp.eq.s32.totalorder %s23, 0
      %p44 = por %p42, %p43
      %p45 = scmp.ne.s32.totalorder %s31, %s32
      %p46 = scmp.eq.s32.totalorder %s24, 1
      %p47 = por %p45, %p46
      %p49 = scmp.ne.s32.totalorder %s32, %s48
      %p50 = scmp.eq.s32.totalorder %s24, 0
      %p51 = por %p49, %p50
      %s53 = sadd.s32 %s52, 1
      %p56 = scmp.eq.s32.totalorder %s18, 1
      %p57 = scmp.ne.s32.totalorder %s52, %s54
      %p58 = scmp.eq.s32.totalorder %s18, 0
      %p59 = por %p57, %p58
      %p60 = scmp.ne.s32.totalorder %s52, %s54
      %p61 = scmp.eq.s32.totalorder %s23, 1
      %p62 = por %p60, %p61
      %p63 = scmp.ne.s32.totalorder %s54, %s55
      %p64 = scmp.eq.s32.totalorder %s23, 0
      %p65 = por %p63, %p64
      %p66 = scmp.ne.s32.totalorder %s54, %s55
      %p67 = scmp.eq.s32.totalorder %s24, 1
      %p68 = por %p66, %p67
      %p70 = scmp.ne.s32.totalorder %s55, %s69
      %p71 = scmp.eq.s32.totalorder %s24, 0
      %p72 = por %p70, %p71
      %s74 = sadd.s32 %s73, 1
      %p77 = scmp.eq.s32.totalorder %s18, 1
      %p78 = scmp.ne.s32.totalorder %s73, %s75
      %p79 = scmp.eq.s32.totalorder %s18, 0
      %p80 = por %p78, %p79
      %p81 = scmp.ne.s32.totalorder %s73, %s75
      %p82 = scmp.eq.s32.totalorder %s23, 1
      %p83 = por %p81, %p82
      %p84 = scmp.ne.s32.totalorder %s75, %s76
      %p85 = scmp.eq.s32.totalorder %s23, 0
      %p86 = por %p84, %p85
      %p87 = scmp.ne.s32.totalorder %s75, %s76
      %p88 = scmp.eq.s32.totalorder %s24, 1
      %p89 = por %p87, %p88
      %p91 = scmp.ne.s32.totalorder %s76, %s90
      %p92 = scmp.eq.s32.totalorder %s24, 0
      %p93 = por %p91, %p92
      %s95 = sadd.s32 %s94, 1
      %p98 = scmp.eq.s32.totalorder %s18, 1
      %p99 = scmp.ne.s32.totalorder %s94, %s96
      %p100 = scmp.eq.s32.totalorder %s18, 0
      %p101 = por %p99, %p100
      %p102 = scmp.ne.s32.totalorder %s94, %s96
      %p103 = scmp.eq.s32.totalorder %s23, 1
      %p104 = por %p102, %p103
      %p105 = scmp.ne.s32.totalorder %s96, %s97
      %p106 = scmp.eq.s32.totalorder %s23, 0
      %p107 = por %p105, %p106
      %p108 = scmp.ne.s32.totalorder %s96, %s97
      %p109 = scmp.eq.s32.totalorder %s24, 1
      %p110 = por %p108, %p109
      %p112 = scmp.ne.s32.totalorder %s97, %s111
      %p113 = scmp.eq.s32.totalorder %s24, 0
      %p114 = por %p112, %p113
      %s116 = sadd.s32 %s115, 1
      %p119 = scmp.eq.s32.totalorder %s18, 1
      %p120 = scmp.ne.s32.totalorder %s115, %s117
      %p121 = scmp.eq.s32.totalorder %s18, 0
      %p122 = por %p120, %p121
      %p123 = scmp.ne.s32.totalorder %s115, %s117
      %p124 = scmp.eq.s32.totalorder %s23, 1
      %p125 = por %p123, %p124
      %p126 = scmp.ne.s32.totalorder %s117, %s118
      %p127 = scmp.eq.s32.totalorder %s23, 0
      %p128 = por %p126, %p127
      %p129 = scmp.ne.s32.totalorder %s117, %s118
      %p130 = scmp.eq.s32.totalorder %s24, 1
      %p131 = por %p129, %p130
      %p133 = scmp.ne.s32.totalorder %s118, %s132
      %p134 = scmp.eq.s32.totalorder %s24, 0
      %p135 = por %p133, %p134
      %s137 = sadd.s32 %s136, 1
      %p140 = scmp.eq.s32.totalorder %s18, 1
      %p141 = scmp.ne.s32.totalorder %s136, %s138
      %p142 = scmp.eq.s32.totalorder %s18, 0
      %p143 = por %p141, %p142
      %p144 = scmp.ne.s32.totalorder %s136, %s138
      %p145 = scmp.eq.s32.totalorder %s23, 1
      %p146 = por %p144, %p145
      %p147 = scmp.ne.s32.totalorder %s138, %s139
      %p148 = scmp.eq.s32.totalorder %s23, 0
      %p149 = por %p147, %p148
      %p150 = scmp.ne.s32.totalorder %s138, %s139
      %p151 = scmp.eq.s32.totalorder %s24, 1
      %p152 = por %p150, %p151
      %p154 = scmp.ne.s32.totalorder %s139, %s153
      %p155 = scmp.eq.s32.totalorder %s24, 0
      %p156 = por %p154, %p155
      %s157 = ssub.s32 %s18, %s25
      %p158 = scmp.eq.s32.totalorder %s157, 0
      %s160 = sadd.s32 %s159, 1
      %s161 = scalar_select %p158, %s159, %s160
      %p164 = pneg %p158
      %p165 = scmp.eq.s32.totalorder %s18, 1
      %p166 = por %p164, %p165
      %p167 = scmp.ne.s32.totalorder %s159, %s162
      %p168 = scmp.eq.s32.totalorder %s18, 0
      %p169 = por %p167, %p168
      %p170 = scmp.ne.s32.totalorder %s159, %s162
      %p171 = scmp.eq.s32.totalorder %s23, 1
      %p172 = por %p170, %p171
      %p173 = scmp.ne.s32.totalorder %s162, %s163
      %p174 = scmp.eq.s32.totalorder %s23, 0
      %p175 = por %p173, %p174
      %p176 = scmp.ne.s32.totalorder %s162, %s163
      %p177 = scmp.eq.s32.totalorder %s24, 1
      %p178 = por %p176, %p177
      %p180 = scmp.ne.s32.totalorder %s163, %s179
      %p181 = scmp.eq.s32.totalorder %s24, 0
      %p182 = por %p180, %p181
      %p183 = scmp.le.s32.totalorder 1, %s18
      %p184 = scmp.lt.s32.totalorder %s18, 3
      %p185 = pnand %p183, %p184
      %p186 = pneg %p185
      // Predicated region
      $region9: #{tpu_custom_call.1} parent=5 // pred_check
        _
      $region10: #{tpu_custom_call.1} parent=5 // pred_check_branch
        %188 = sbr.rel (%p185) target = $region12
      $region11: #{tpu_custom_call.1} parent=5 // pred_region
        %s189 = ssub.s32 %s18, 1
        // Predicated region
        $region13: #{tpu_custom_call.1} parent=11 // pred_check
          %p190 = pneg %p65
        $region14: #{tpu_custom_call.1} parent=11 // pred_check_branch
          %192 = sbr.rel (%p190) target = $region16
        $region15: #{tpu_custom_call.1} parent=11 // pred_region
          _
        $region16: #{tpu_custom_call.1} parent=11 // pred_fallthru
          _
        // Predicated region
        $region17: #{tpu_custom_call.1} parent=11 // pred_check
          %p193 = pneg %p86
        $region18: #{tpu_custom_call.1} parent=11 // pred_check_branch
          %195 = sbr.rel (%p193) target = $region20
        $region19: #{tpu_custom_call.1} parent=11 // pred_region
          _
        $region20: #{tpu_custom_call.1} parent=11 // pred_fallthru
          _
        // Predicated region
        $region21: #{tpu_custom_call.1} parent=11 // pred_check
          %p196 = pneg %p107
        $region22: #{tpu_custom_call.1} parent=11 // pred_check_branch
          %198 = sbr.rel (%p196) target = $region24
        $region23: #{tpu_custom_call.1} parent=11 // pred_region
          _
        $region24: #{tpu_custom_call.1} parent=11 // pred_fallthru
          _
        // Predicated region
        $region25: #{tpu_custom_call.1} parent=11 // pred_check
          %p199 = pneg %p128
        $region26: #{tpu_custom_call.1} parent=11 // pred_check_branch
          %201 = sbr.rel (%p199) target = $region28
        $region27: #{tpu_custom_call.1} parent=11 // pred_region
          _
        $region28: #{tpu_custom_call.1} parent=11 // pred_fallthru
          _
        // Predicated region
        $region29: #{tpu_custom_call.1} parent=11 // pred_check
          %p202 = pneg %p149
        $region30: #{tpu_custom_call.1} parent=11 // pred_check_branch
          %204 = sbr.rel (%p202) target = $region32
        $region31: #{tpu_custom_call.1} parent=11 // pred_region
          _
        $region32: #{tpu_custom_call.1} parent=11 // pred_fallthru
          _
      $region12: #{tpu_custom_call.1} parent=5 // pred_fallthru
        _
      %p205 = scmp.lt.s32.totalorder %s18, 2
      // Predicated region
      $region33: #{tpu_custom_call.1} parent=5 // pred_check
        %p206 = pneg %p205
      $region34: #{tpu_custom_call.1} parent=5 // pred_check_branch
        %208 = sbr.rel (%p206) target = $region36
      $region35: #{tpu_custom_call.1} parent=5 // pred_region
        // Predicated region
        $region37: #{tpu_custom_call.1} parent=35 // pred_check
          %p209 = pneg %p38
        $region38: #{tpu_custom_call.1} parent=35 // pred_check_branch
          %211 = sbr.rel (%p209) target = $region40
        $region39: #{tpu_custom_call.1} parent=35 // pred_region
          %s212 = sand.u32 %s28, 1
          %s213 = scalar_lea.sflag [#allocation4], %s212
          %s214 = sand.u32 %s28, 1
          %s215 = smul.addr %s214, 32
          %s216 = scalar_lea.vmem [#allocation3], %s215
          %218 = vsyncadd %s213, 0
          %s219 = smul.addr %s18, 8
          %s220 = scalar_lea.hbm %s0, %s219
          %s221 = sshll.u32 %s220, 4
          %s222 = int_to_ptr.hbm [resolvable:$true] %s221
          %s223 = sshll.u32 %s216, 4
          %s224 = int_to_ptr.vmem [resolvable:$true] %s223
          %229 = dma.hbm_to_vmem [thread:$0]  %s222, 512, %s224, %s213, 256, 128, 8
        $region40: #{tpu_custom_call.1} parent=35 // pred_fallthru
          _
      $region36: #{tpu_custom_call.1} parent=5 // pred_fallthru
        _
      %p230 = scmp.le.s32.totalorder 1, %s18
      %p231 = scmp.lt.s32.totalorder %s18, 3
      %p232 = pnand %p230, %p231
      %p233 = pneg %p232
      // Predicated region
      $region41: #{tpu_custom_call.1} parent=5 // pred_check
        _
      $region42: #{tpu_custom_call.1} parent=5 // pred_check_branch
        %235 = sbr.rel (%p232) target = $region44
      $region43: #{tpu_custom_call.1} parent=5 // pred_region
        %s236 = ssub.s32 %s18, 1
        %s237 = sand.u32 %s31, 1
        %s238 = scalar_lea.sflag [#allocation4], %s237
        %s239 = sand.u32 %s31, 1
        %s240 = smul.addr %s239, 32
        %s241 = scalar_lea.vmem [#allocation3], %s240
        // Predicated region
        $region45: #{tpu_custom_call.1} parent=43 // pred_check
          %p242 = pneg %p44
        $region46: #{tpu_custom_call.1} parent=43 // pred_check_branch
          %244 = sbr.rel (%p242) target = $region48
        $region47: #{tpu_custom_call.1} parent=43 // pred_region
          %246 = dma.done %s238, 512
        $region48: #{tpu_custom_call.1} parent=43 // pred_fallthru
          _
        %s247 = sand.u32 %s31, 1
        %s248 = scalar_lea.sflag [#allocation4], %s247
        %s249 = sand.u32 %s31, 1
        %s250 = smul.addr %s249, 32
        %s251 = scalar_lea.vmem [#allocation3], %s250
        %p252 = pneg %p44
        %p253 = pneg %p41
        %p254 = pneg %p65
        %p255 = pneg %p62
        %p256 = pneg %p86
        %p257 = pneg %p83
        %p258 = pneg %p107
        %p259 = pneg %p104
        %p260 = pneg %p128
        %p261 = pneg %p125
        %p262 = pneg %p149
        %p263 = pneg %p146
        %p264 = pneg %p175
        %p265 = pneg %p172
        %s266 = sand.u32 %s162, 1
        %s267 = scalar_lea.sflag [#allocation5], %s266
        %s268 = sand.u32 %s162, 1
        %s269 = smul.addr %s268, 2
        %s270 = scalar_lea.vmem [#allocation6], %s269
        %v272 = vld [vmem:[%s241] sm:$0xff]
        %v273 = vld [vmem:[%s241 + $0x8] sm:$0xff]
        %v274 = vld [vmem:[%s241 + $0x10] sm:$0xff]
        %v275 = vld [vmem:[%s241 + $0x18] sm:$0xff]
        %v276 = vlaneseq
        %v277 = vand.u32 %v276, 127
        %v278 = vand.u32 %v277, 127
        %279 = vrot.lane.b32.xlu0 %v272, 3
        %v280 = vpop.permute.xlu0 %279
        %281 = vrot.lane.b32.xlu0 %v273, 3
        %v282 = vpop.permute.xlu0 %281
        %283 = vrot.lane.b32.xlu0 %v274, 3
        %v284 = vpop.permute.xlu0 %283
        %285 = vrot.lane.b32.xlu0 %v275, 3
        %v286 = vpop.permute.xlu0 %285
        %v287 = vadd.s32 %v278, 4294967293
        %vm288 = vcmp.ge.s32.totalorder %v287, 0
        %vm289 = vcmp.lt.s32.totalorder %v287, 128
        %vm290 = vmand %vm288, %vm289
        %v291 = vsel %vm290, 1, 0
        %vm292 = vcmp.eq.s32.totalorder %v291, 1
        %v293 = vsel %vm292, %v280, 0.0
        %v294 = vsel %vm292, %v282, 0.0
        %v295 = vsel %vm292, %v284, 0.0
        %v296 = vsel %vm292, %v286, 0.0
        %v297 = vpack.c.bf16 %v293, %v293
        %v298 = vpack.c.bf16 %v294, %v294
        %v299 = vpack.c.bf16 %v295, %v295
        %v300 = vpack.c.bf16 %v296, %v296
        %301 = vst [vmem:[#allocation2] sm:$0xf] %v297
        %302 = vst [vmem:[#allocation2 + $0x4] sm:$0xf] %v298
        %303 = vst [vmem:[#allocation2 + $0x8] sm:$0xf] %v299
        %304 = vst [vmem:[#allocation2 + $0xc] sm:$0xf] %v300
        %305 = vrot.lane.b32.xlu0 %v272, 2
        %v306 = vpop.permute.xlu0 %305
        %307 = vrot.lane.b32.xlu0 %v273, 2
        %v308 = vpop.permute.xlu0 %307
        %309 = vrot.lane.b32.xlu0 %v274, 2
        %v310 = vpop.permute.xlu0 %309
        %311 = vrot.lane.b32.xlu0 %v275, 2
        %v312 = vpop.permute.xlu0 %311
        %v313 = vadd.s32 %v278, 4294967294
        %vm314 = vcmp.ge.s32.totalorder %v313, 0
        %vm315 = vcmp.lt.s32.totalorder %v313, 128
        %vm316 = vmand %vm314, %vm315
        %v317 = vsel %vm316, 1, 0
        %vm318 = vcmp.eq.s32.totalorder %v317, 1
        %v319 = vsel %vm318, %v306, 0.0
        %v320 = vsel %vm318, %v308, 0.0
        %v321 = vsel %vm318, %v310, 0.0
        %v322 = vsel %vm318, %v312, 0.0
        %v323 = vpack.c.bf16 %v319, %v319
        %v324 = vpack.c.bf16 %v320, %v320
        %v325 = vpack.c.bf16 %v321, %v321
        %v326 = vpack.c.bf16 %v322, %v322
        %327 = vst [vmem:[#allocation2 + $0x10] sm:$0xf] %v323
        %328 = vst [vmem:[#allocation2 + $0x14] sm:$0xf] %v324
        %329 = vst [vmem:[#allocation2 + $0x18] sm:$0xf] %v325
        %330 = vst [vmem:[#allocation2 + $0x1c] sm:$0xf] %v326
        %331 = vrot.lane.b32.xlu0 %v272, 1
        %v332 = vpop.permute.xlu0 %331
        %333 = vrot.lane.b32.xlu0 %v273, 1
        %v334 = vpop.permute.xlu0 %333
        %335 = vrot.lane.b32.xlu0 %v274, 1
        %v336 = vpop.permute.xlu0 %335
        %337 = vrot.lane.b32.xlu0 %v275, 1
        %v338 = vpop.permute.xlu0 %337
        %v339 = vadd.s32 %v278, 4294967295
        %vm340 = vcmp.ge.s32.totalorder %v339, 0
        %vm341 = vcmp.lt.s32.totalorder %v339, 128
        %vm342 = vmand %vm340, %vm341
        %v343 = vsel %vm342, 1, 0
        %vm344 = vcmp.eq.s32.totalorder %v343, 1
        %v345 = vsel %vm344, %v332, 0.0
        %v346 = vsel %vm344, %v334, 0.0
        %v347 = vsel %vm344, %v336, 0.0
        %v348 = vsel %vm344, %v338, 0.0
        %v349 = vpack.c.bf16 %v345, %v345
        %v350 = vpack.c.bf16 %v346, %v346
        %v351 = vpack.c.bf16 %v347, %v347
        %v352 = vpack.c.bf16 %v348, %v348
        %353 = vst [vmem:[#allocation2 + $0x20] sm:$0xf] %v349
        %354 = vst [vmem:[#allocation2 + $0x24] sm:$0xf] %v350
        %355 = vst [vmem:[#allocation2 + $0x28] sm:$0xf] %v351
        %356 = vst [vmem:[#allocation2 + $0x2c] sm:$0xf] %v352
        %v357 = vpack.c.bf16 %v272, %v272
        %v358 = vpack.c.bf16 %v273, %v273
        %v359 = vpack.c.bf16 %v274, %v274
        %v360 = vpack.c.bf16 %v275, %v275
        %361 = vst [vmem:[#allocation2 + $0x30] sm:$0xf] %v357
        %362 = vst [vmem:[#allocation2 + $0x34] sm:$0xf] %v358
        %363 = vst [vmem:[#allocation2 + $0x38] sm:$0xf] %v359
        %364 = vst [vmem:[#allocation2 + $0x3c] sm:$0xf] %v360
        %365 = vrot.lane.b32.xlu0 %v272, 127
        %v366 = vpop.permute.xlu0 %365
        %367 = vrot.lane.b32.xlu0 %v273, 127
        %v368 = vpop.permute.xlu0 %367
        %369 = vrot.lane.b32.xlu0 %v274, 127
        %v370 = vpop.permute.xlu0 %369
        %371 = vrot.lane.b32.xlu0 %v275, 127
        %v372 = vpop.permute.xlu0 %371
        %v373 = vadd.s32 %v278, 1
        %vm374 = vcmp.ge.s32.totalorder %v373, 0
        %vm375 = vcmp.lt.s32.totalorder %v373, 128
        %vm376 = vmand %vm374, %vm375
        %v377 = vsel %vm376, 1, 0
        %vm378 = vcmp.eq.s32.totalorder %v377, 1
        %v379 = vsel %vm378, %v366, 0.0
        %v380 = vsel %vm378, %v368, 0.0
        %v381 = vsel %vm378, %v370, 0.0
        %v382 = vsel %vm378, %v372, 0.0
        %v383 = vpack.c.bf16 %v379, %v379
        %v384 = vpack.c.bf16 %v380, %v380
        %v385 = vpack.c.bf16 %v381, %v381
        %v386 = vpack.c.bf16 %v382, %v382
        %387 = vst [vmem:[#allocation2 + $0x40] sm:$0xf] %v383
        %388 = vst [vmem:[#allocation2 + $0x44] sm:$0xf] %v384
        %389 = vst [vmem:[#allocation2 + $0x48] sm:$0xf] %v385
        %390 = vst [vmem:[#allocation2 + $0x4c] sm:$0xf] %v386
        %391 = vrot.lane.b32.xlu0 %v272, 126
        %v392 = vpop.permute.xlu0 %391
        %393 = vrot.lane.b32.xlu0 %v273, 126
        %v394 = vpop.permute.xlu0 %393
        %395 = vrot.lane.b32.xlu0 %v274, 126
        %v396 = vpop.permute.xlu0 %395
        %397 = vrot.lane.b32.xlu0 %v275, 126
        %v398 = vpop.permute.xlu0 %397
        %v399 = vadd.s32 %v278, 2
        %vm400 = vcmp.ge.s32.totalorder %v399, 0
        %vm401 = vcmp.lt.s32.totalorder %v399, 128
        %vm402 = vmand %vm400, %vm401
        %v403 = vsel %vm402, 1, 0
        %vm404 = vcmp.eq.s32.totalorder %v403, 1
        %v405 = vsel %vm404, %v392, 0.0
        %v406 = vsel %vm404, %v394, 0.0
        %v407 = vsel %vm404, %v396, 0.0
        %v408 = vsel %vm404, %v398, 0.0
        %v409 = vpack.c.bf16 %v405, %v405
        %v410 = vpack.c.bf16 %v406, %v406
        %v411 = vpack.c.bf16 %v407, %v407
        %v412 = vpack.c.bf16 %v408, %v408
        %413 = vst [vmem:[#allocation2 + $0x50] sm:$0xf] %v409
        %414 = vst [vmem:[#allocation2 + $0x54] sm:$0xf] %v410
        %415 = vst [vmem:[#allocation2 + $0x58] sm:$0xf] %v411
        %416 = vst [vmem:[#allocation2 + $0x5c] sm:$0xf] %v412
        %417 = vrot.lane.b32.xlu0 %v272, 125
        %v418 = vpop.permute.xlu0 %417
        %419 = vrot.lane.b32.xlu0 %v273, 125
        %v420 = vpop.permute.xlu0 %419
        %421 = vrot.lane.b32.xlu0 %v274, 125
        %v422 = vpop.permute.xlu0 %421
        %423 = vrot.lane.b32.xlu0 %v275, 125
        %v424 = vpop.permute.xlu0 %423
        %v425 = vadd.s32 %v278, 3
        %vm426 = vcmp.ge.s32.totalorder %v425, 0
        %vm427 = vcmp.lt.s32.totalorder %v425, 128
        %vm428 = vmand %vm426, %vm427
        %v429 = vsel %vm428, 1, 0
        %vm430 = vcmp.eq.s32.totalorder %v429, 1
        %v431 = vsel %vm430, %v418, 0.0
        %v432 = vsel %vm430, %v420, 0.0
        %v433 = vsel %vm430, %v422, 0.0
        %v434 = vsel %vm430, %v424, 0.0
        %v435 = vpack.c.bf16 %v431, %v431
        %v436 = vpack.c.bf16 %v432, %v432
        %v437 = vpack.c.bf16 %v433, %v433
        %v438 = vpack.c.bf16 %v434, %v434
        %439 = vst [vmem:[#allocation2 + $0x60] sm:$0xf] %v435
        %440 = vst [vmem:[#allocation2 + $0x64] sm:$0xf] %v436
        %441 = vst [vmem:[#allocation2 + $0x68] sm:$0xf] %v437
        %442 = vst [vmem:[#allocation2 + $0x6c] sm:$0xf] %v438
        %v443 = vld [vmem:[%s1] sm:$0xff]
        %v444 = vld [vmem:[%s1 + $0x8] sm:$0xff]
        %v445 = vld [vmem:[#allocation2] sm:$0xf]
        %v446 = vld [vmem:[#allocation2 + $0x4] sm:$0xf]
        %v447 = vld [vmem:[#allocation2 + $0x8] sm:$0xf]
        %v448 = vld [vmem:[#allocation2 + $0xc] sm:$0xf]
        %v449 = vld [vmem:[#allocation2 + $0x10] sm:$0xf]
        %v450 = vld [vmem:[#allocation2 + $0x14] sm:$0xf]
        %v451 = vld [vmem:[#allocation2 + $0x18] sm:$0xf]
        %v452 = vld [vmem:[#allocation2 + $0x1c] sm:$0xf]
        %v453 = vld [vmem:[#allocation2 + $0x20] sm:$0xf]
        %v454 = vld [vmem:[#allocation2 + $0x24] sm:$0xf]
        %v455 = vld [vmem:[#allocation2 + $0x28] sm:$0xf]
        %v456 = vld [vmem:[#allocation2 + $0x2c] sm:$0xf]
        %v457 = vld [vmem:[#allocation2 + $0x30] sm:$0xf]
        %v458 = vld [vmem:[#allocation2 + $0x34] sm:$0xf]
        %v459 = vld [vmem:[#allocation2 + $0x38] sm:$0xf]
        %v460 = vld [vmem:[#allocation2 + $0x3c] sm:$0xf]
        %v461 = vld [vmem:[#allocation2 + $0x40] sm:$0xf]
        %v462 = vld [vmem:[#allocation2 + $0x44] sm:$0xf]
        %v463 = vld [vmem:[#allocation2 + $0x48] sm:$0xf]
        %v464 = vld [vmem:[#allocation2 + $0x4c] sm:$0xf]
        %v465 = vld [vmem:[#allocation2 + $0x50] sm:$0xf]
        %v466 = vld [vmem:[#allocation2 + $0x54] sm:$0xf]
        %v467 = vld [vmem:[#allocation2 + $0x58] sm:$0xf]
        %v468 = vld [vmem:[#allocation2 + $0x5c] sm:$0xf]
        %v469 = vld [vmem:[#allocation2 + $0x60] sm:$0xf]
        %v470 = vld [vmem:[#allocation2 + $0x64] sm:$0xf]
        %v471 = vld [vmem:[#allocation2 + $0x68] sm:$0xf]
        %v472 = vld [vmem:[#allocation2 + $0x6c] sm:$0xf]
        %v475 = vunpack.c.l.b16 %v443
        %v476 = vunpack.c.h.b16 %v443
        %v477 = vunpack.c.l.b16 %v444
        %v478 = vunpack.c.h.b16 %v444
        %v479 = vpack.c.b16 %v477, %v475
        %v480 = vpack.c.b16 %v478, %v476
        %v510 = vunpack.c.l.b16 %v445
        %v511 = vunpack.c.l.b16 %v446
        %v512 = vunpack.c.l.b16 %v447
        %v513 = vunpack.c.l.b16 %v448
        %v514 = vunpack.c.l.b16 %v449
        %v515 = vunpack.c.l.b16 %v450
        %v516 = vunpack.c.l.b16 %v451
        %v517 = vunpack.c.l.b16 %v452
        %v518 = vunpack.c.l.b16 %v453
        %v519 = vunpack.c.l.b16 %v454
        %v520 = vunpack.c.l.b16 %v455
        %v521 = vunpack.c.l.b16 %v456
        %v522 = vunpack.c.l.b16 %v457
        %v523 = vunpack.c.l.b16 %v458
        %v524 = vunpack.c.l.b16 %v459
        %v525 = vunpack.c.l.b16 %v460
        %v526 = vunpack.c.l.b16 %v461
        %v527 = vunpack.c.l.b16 %v462
        %v528 = vunpack.c.l.b16 %v463
        %v529 = vunpack.c.l.b16 %v464
        %v530 = vunpack.c.l.b16 %v465
        %v531 = vunpack.c.l.b16 %v466
        %v532 = vunpack.c.l.b16 %v467
        %v533 = vunpack.c.l.b16 %v468
        %v534 = vunpack.c.l.b16 %v469
        %v535 = vunpack.c.l.b16 %v470
        %v536 = vunpack.c.l.b16 %v471
        %v537 = vunpack.c.l.b16 %v472
        %v538 = vpack.c.b16 %v511, %v510
        %v539 = vpack.c.b16 %v513, %v512
        %v540 = vpack.c.b16 %v515, %v514
        %v541 = vpack.c.b16 %v517, %v516
        %v542 = vpack.c.b16 %v519, %v518
        %v543 = vpack.c.b16 %v521, %v520
        %v544 = vpack.c.b16 %v523, %v522
        %v545 = vpack.c.b16 %v525, %v524
        %v546 = vpack.c.b16 %v527, %v526
        %v547 = vpack.c.b16 %v529, %v528
        %v548 = vpack.c.b16 %v531, %v530
        %v549 = vpack.c.b16 %v533, %v532
        %v550 = vpack.c.b16 %v535, %v534
        %v551 = vpack.c.b16 %v537, %v536
        %vm566 = vcmask 785408
        %v568 = vsel %vm566, %v480, 0
        %570 = vmatpush.bf16.msra.mxu0 %v545
        %571 = vmatpush.bf16.msra.mxu0 %v544
        %572 = vmatpush.bf16.msra.mxu0 %v543
        %573 = vmatpush.bf16.msra.mxu0 %v542
        %574 = vmatpush.bf16.msra.mxu0 %v541
        %575 = vmatpush.bf16.msra.mxu0 %v540
        %576 = vmatpush.bf16.msra.mxu0 %v539
        %577 = vmatpush.bf16.msra.mxu0 %v538
        %578 = vmatmul.bf16.gmra.mxu0 %v479
        %v579 = vpop.f32.mrf.mxu0
        %v580 = vadd.f32 0.0, %v579
        %v581 = vpop.f32.mrf.mxu0
        %v582 = vadd.f32 0.0, %v581
        %583 = vdwg.mxu0
        %584 = vmatpush.bf16.msra.mxu0 0
        %585 = vmatpush.bf16.msra.mxu0 0
        %586 = vmatpush.bf16.msra.mxu0 %v551
        %587 = vmatpush.bf16.msra.mxu0 %v550
        %588 = vmatpush.bf16.msra.mxu0 %v549
        %589 = vmatpush.bf16.msra.mxu0 %v548
        %590 = vmatpush.bf16.msra.mxu0 %v547
        %591 = vmatpush.bf16.msra.mxu0 %v546
        %592 = vmatmul.bf16.gmra.mxu0 %v568
        %v593 = vpop.f32.mrf.mxu0
        %v594 = vadd.f32 %v580, %v593
        %v595 = vpop.f32.mrf.mxu0
        %v596 = vadd.f32 %v582, %v595
        %597 = vdwg.mxu0
        %v598 = vld [vmem:[%s2] sm:$0xff]
        %v599 = vld [vmem:[%s2 + $0x8] sm:$0xff]
        %601 = vset.pattern.permute.xlu0 0
        %602 = vperm.xlu0 %601, %v598
        %v603 = vpop.permute.xlu0 %602
        %606 = vset.pattern.permute.xlu0 0
        %607 = vperm.xlu0 %606, %v599
        %v608 = vpop.permute.xlu0 %607
        %v610 = vmul.f32 %v594, %v603
        %v611 = vmul.f32 %v596, %v608
        %v612 = vld [vmem:[%s3] sm:$0xff]
        %v613 = vld [vmem:[%s3 + $0x8] sm:$0xff]
        %615 = vset.pattern.permute.xlu0 0
        %616 = vperm.xlu0 %615, %v612
        %v617 = vpop.permute.xlu0 %616
        %620 = vset.pattern.permute.xlu0 0
        %621 = vperm.xlu0 %620, %v613
        %v622 = vpop.permute.xlu0 %621
        %v624 = vadd.f32 %v610, %v617
        %v625 = vadd.f32 %v611, %v622
        %v626 = vmax.f32 %v624, 0.0
        %v627 = vmax.f32 %v625, 0.0
        %v628 = vld [vmem:[%s4] sm:$0x1]
        %v629 = vpack.c.bf16 %v627, %v626
        %v630 = vld [vmem:[%s5] sm:$0x3]
        %632 = vset.pattern.permute.xlu0 0
        %633 = vperm.xlu0 %632, %v630
        %v634 = vpop.permute.xlu0 %633
        %vm636 = vcmask 130048
        %v638 = vsel %vm636, %v628, 0
        %640 = vmatpush.bf16.msra.mxu0 0
        %641 = vmatpush.bf16.msra.mxu0 0
        %642 = vmatpush.bf16.msra.mxu0 0
        %643 = vmatpush.bf16.msra.mxu0 0
        %644 = vmatpush.bf16.msra.mxu0 0
        %645 = vmatpush.bf16.msra.mxu0 0
        %646 = vmatpush.bf16.msra.mxu0 0
        %647 = vmatpush.bf16.msra.mxu0 %v629
        %648 = vmatmul.bf16.gmra.mxu0 %v638
        %v649 = vpop.f32.mrf.mxu0
        %v650 = vadd.f32 %v634, %v649
        %v651 = vpop.f32.mrf.mxu0
        %652 = vdwg.mxu0
        %v653 = vmax.f32 %v650, -30.0
        %v654 = vmin.f32 %v653, 30.0
        %v655 = vsub.f32 0.0, %v654
        %v656 = vmul.f32 %v655, 1.442695
        %v657 = vpow.pop %v656
        %v658 = vadd.f32 %v657, 1.0
        %v659 = vrcp.pop %v658
        %660 = vst [vmem:[%s270] sm:$0x3] %v659
        %s661 = sand.u32 %s162, 1
        %s662 = scalar_lea.sflag [#allocation5], %s661
        %s663 = sand.u32 %s162, 1
        %s664 = smul.addr %s663, 2
        %s665 = scalar_lea.vmem [#allocation6], %s664
        // Predicated region
        $region49: #{tpu_custom_call.1} parent=43 // pred_check
          %p666 = pneg %p172
        $region50: #{tpu_custom_call.1} parent=43 // pred_check_branch
          %668 = sbr.rel (%p666) target = $region52
        $region51: #{tpu_custom_call.1} parent=43 // pred_region
          %670 = vsyncadd %s662, 0
          %s671 = smul.addr %s23, 2
          %s672 = scalar_lea.hbm %s6, %s671
          %s674 = sshll.u32 %s665, 4
          %s675 = int_to_ptr.vmem [resolvable:$true] %s674
          %s676 = sshll.u32 %s672, 4
          %s677 = int_to_ptr.hbm [resolvable:$true] %s676
          %679 = dma.vmem_to_hbm [thread:$0]  %s675, 32, %s677, %s662
        $region52: #{tpu_custom_call.1} parent=43 // pred_fallthru
          _
      $region44: #{tpu_custom_call.1} parent=5 // pred_fallthru
        _
      %p680 = scmp.le.s32.totalorder 2, %s18
      // Predicated region
      $region53: #{tpu_custom_call.1} parent=5 // pred_check
        %p681 = pneg %p680
      $region54: #{tpu_custom_call.1} parent=5 // pred_check_branch
        %683 = sbr.rel (%p681) target = $region56
      $region55: #{tpu_custom_call.1} parent=5 // pred_region
        %s684 = ssub.s32 %s18, 2
        // Predicated region
        $region57: #{tpu_custom_call.1} parent=55 // pred_check
          %p685 = pneg %p178
        $region58: #{tpu_custom_call.1} parent=55 // pred_check_branch
          %687 = sbr.rel (%p685) target = $region60
        $region59: #{tpu_custom_call.1} parent=55 // pred_region
          %s688 = sand.u32 %s163, 1
          %s689 = scalar_lea.sflag [#allocation5], %s688
          %s690 = sand.u32 %s163, 1
          %s691 = smul.addr %s690, 2
          %s692 = scalar_lea.vmem [#allocation6], %s691
          %694 = dma.done %s689, 32
        $region60: #{tpu_custom_call.1} parent=55 // pred_fallthru
          _
      $region56: #{tpu_custom_call.1} parent=5 // pred_fallthru
        _
    $region6: #{tpu_custom_call.1} parent=1 // loop_footer
      %s22 = sadd.s32 1, %s18
    $region7: #{tpu_custom_call.1} parent=1 // loop_footer_branch
      %17 = sbr.rel target = $region3
    $region8: #{tpu_custom_call.1} parent=1 // loop_exit
      _
    %695 = vsyncpa [#allocation4], 1
    %s696 = scalar_lea.sflag [#allocation4], 1
    %697 = vsyncpa %s696, 1
    %698 = vsyncpa [#allocation5], 1
    %s699 = scalar_lea.sflag [#allocation5], 1
    %700 = vsyncpa %s699, 1

</llo_original>
